<compile_context>
chip_gen: v6e
topology: v6e:2x2x1
jax: 0.10.0
libtpu: 0.0.40
codegen_flags: <defaults>
</compile_context>

<pallas_src>
import math

import jax
import jax.numpy as jnp
from jax.experimental import pallas as pl
from jax.experimental.pallas import tpu as pltpu


# ----------------------------- parameter setup ------------------------------
def make_positional_encoding_table(d_model: int, max_len: int = 1000,
                                   dtype=jnp.float32) -> jnp.ndarray:
    """Deterministic sinusoidal table, identical to the PyTorch __init__.

    Handles odd d_model (cos half has floor(d/2) columns).
    """
    position = jnp.arange(0, max_len, dtype=jnp.float32)[:, None]          # (max_len, 1)
    div_term = jnp.exp(jnp.arange(0, d_model, 2, dtype=jnp.float32)
                       * -(math.log(10000.0) / d_model))                   # (ceil(d/2),)
    angles = position * div_term                                           # (max_len, ceil(d/2))
    pe = jnp.zeros((max_len, d_model), dtype=jnp.float32)
    pe = pe.at[:, 0::2].set(jnp.sin(angles))
    pe = pe.at[:, 1::2].set(jnp.cos(angles)[:, : d_model // 2])
    return pe[None].astype(dtype)                                          # (1, max_len, d_model)


# --------------------------------- kernel -----------------------------------
def pos_enc_kernel(x_ref, pe_ref, o_ref):
    # x_ref/o_ref: (TILE_R, TILE_C) lane-dense tiles; pe_ref: (1, TILE_C) row
    # that broadcasts over the batch rows.  Pure VPU elementwise add.
    o_ref[...] = x_ref[...] + pe_ref[...]


def _choose_tiles(n_rows: int, n_cols: int, itemsize: int):
    """Pick (row, col) tile sizes for the (B, L*D) view.

    Targets ~2 MiB per x tile (double-buffered in + out + pe fits the v5e
    16 MiB default scoped VMEM with headroom), keeps column tiles multiples
    of 128 lanes (or full extent) and row tiles multiples of 8 sublanes (or
    the full batch), and leaves >=2 grid steps when the batch is big enough
    for v7x's two TensorCores to both stream HBM.
    """
    tile_bytes = 2 << 20
    r_min = n_rows if n_rows < 8 else 8

    # Column tile: lane-dense (multiple of 128) or the full extent.
    col_budget = max(128, tile_bytes // max(r_min * itemsize, 1))
    if n_cols <= col_budget or n_cols <= 128:
        tile_c = n_cols
    else:
        tile_c = max(128, (col_budget // 128) * 128)

    # Row tile: largest multiple of 8 keeping the tile near the byte budget.
    row_cap = max(r_min, tile_bytes // max(tile_c * itemsize, 1))
    if n_rows <= row_cap:
        tile_r = n_rows
    else:
        tile_r = max(8, (row_cap // 8) * 8)

    # Megacore: give the second TensorCore work when the batch is big enough.
    if n_rows >= 16 and pl.cdiv(n_rows, tile_r) * pl.cdiv(n_cols, tile_c) < 2:
        tile_r = max(8, ((n_rows // 2) // 8) * 8)

    return tile_r, tile_c


def positional_encoding(x: jnp.ndarray, pe: jnp.ndarray) -> jnp.ndarray:
    """x: (B, L, D); pe: (1, max_len, D). Returns x + pe[:, :L]."""
    B, L, D = x.shape
    max_len = pe.shape[1]
    assert L <= max_len, f"sequence length {L} exceeds max_len {max_len}"

    # Glue (plain JAX): slice the table, match x's dtype (avoids an in-kernel
    # promote/cast round trip and halves the pe HBM read for bf16 inputs),
    # and flatten to the lane-dense 2-D view.
    LD = L * D
    pe_row = pe[0, :L, :].astype(x.dtype).reshape(1, LD)    # (1, L*D)
    x2 = x.reshape(B, LD)                                   # (B, L*D)

    itemsize = jnp.dtype(x.dtype).itemsize
    tile_r, tile_c = _choose_tiles(B, LD, itemsize)
    grid_r = pl.cdiv(B, tile_r)
    grid_c = pl.cdiv(LD, tile_c)

    out2 = pl.pallas_call(
        pos_enc_kernel,
        out_shape=jax.ShapeDtypeStruct((B, LD), x.dtype),
        # cols outermost so the pe block index is constant across the inner
        # (row) steps and its DMA is skipped for consecutive iterations.
        grid=(grid_c, grid_r),
        in_specs=[
            pl.BlockSpec((tile_r, tile_c), lambda c, r: (r, c)),   # x
            pl.BlockSpec((1, tile_c), lambda c, r: (0, c)),        # pe (bcast over rows)
        ],
        out_specs=pl.BlockSpec((tile_r, tile_c), lambda c, r: (r, c)),
        compiler_params=pltpu.CompilerParams(
            dimension_semantics=("parallel", "parallel")),
        cost_estimate=pl.CostEstimate(
            flops=B * LD,
            transcendentals=0,
            bytes_accessed=(2 * B * LD + LD) * itemsize),
    )(x2, pe_row)

    return out2.reshape(B, L, D)


# ---------------------------------- main -------------------------------------
if __name__ == "__main__":
    d_model = 32
    max_len = 1000
    B, L = 2, 8

    key = jax.random.PRNGKey(0)
    x = jax.random.normal(key, (B, L, d_model), dtype=jnp.float32)

    pe = make_positional_encoding_table(d_model, max_len, dtype=x.dtype)

    out = positional_encoding(x, pe)
    out = jax.block_until_ready(out)

    # reference (pure JAX) check of forward semantics
    ref = x + pe[:, :L]
    assert out.shape == x.shape and out.dtype == x.dtype
    assert jnp.allclose(out, ref, atol=1e-6, rtol=1e-6)

    print("KERNEL_OK")
</pallas_src>

<mosaic_0001>
module attributes {stable_mosaic.version = 11 : i64} {
  func.func @pos_enc_kernel(%arg0: i32, %arg1: i32, %arg2: memref<2x256xf32, #tpu.memory_space<vmem>>, %arg3: memref<1x256xf32, #tpu.memory_space<vmem>>, %arg4: memref<2x256xf32, #tpu.memory_space<vmem>>) attributes {dimension_semantics = [#tpu.dimension_semantics<parallel>, #tpu.dimension_semantics<parallel>], iteration_bounds = array<i64: 1, 1>, scalar_prefetch = 0 : i64, scratch_operands = 0 : i64, tpu.core_type = #tpu.core_type<tc>, window_params = [{transform_indices = @transform_0, window_bounds = array<i64: 2, 256>}, {transform_indices = @transform_1, window_bounds = array<i64: 1, 256>}, {transform_indices = @transform_2, window_bounds = array<i64: 2, 256>}]} {
    %c0 = arith.constant 0 : index
    %c0_0 = arith.constant 0 : index
    %0 = vector.load %arg2[%c0, %c0_0] : memref<2x256xf32, #tpu.memory_space<vmem>>, vector<2x256xf32>
    %c0_1 = arith.constant 0 : index
    %c0_2 = arith.constant 0 : index
    %1 = vector.load %arg3[%c0_1, %c0_2] : memref<1x256xf32, #tpu.memory_space<vmem>>, vector<1x256xf32>
    %2 = vector.broadcast %1 : vector<1x256xf32> to vector<2x256xf32>
    %3 = arith.addf %0, %2 : vector<2x256xf32>
    %c0_3 = arith.constant 0 : index
    %c0_4 = arith.constant 0 : index
    %4 = vector.load %arg4[%c0_3, %c0_4] : memref<2x256xf32, #tpu.memory_space<vmem>>, vector<2x256xf32>
    tpu.vector_store %arg4[%c0_3, %c0_4], %3 {strides = array<i32>} : memref<2x256xf32, #tpu.memory_space<vmem>>, vector<2x256xf32>,
    return
  }
  func.func @transform_0(%arg0: i32, %arg1: i32) -> (i32, i32) {
    %c0_i32 = arith.constant 0 : i32
    return %arg1, %arg0 : i32, i32
  }
  func.func @transform_1(%arg0: i32, %arg1: i32) -> (i32, i32) {
    %c0_i32 = arith.constant 0 : i32
    %c0_i32_0 = arith.constant 0 : i32
    return %c0_i32, %arg0 : i32, i32
  }
  func.func @transform_2(%arg0: i32, %arg1: i32) -> (i32, i32) {
    %c0_i32 = arith.constant 0 : i32
    return %arg1, %arg0 : i32, i32
  }
}

</mosaic_0001>

<llo_original>
// kernel: tpu_custom_call.1
$region0: #{tpu_custom_call.1}
  #allocation0 [shape = 'u32[]', space=smem, size = 0x4, offset = 0x4, fixed_abs, tag = 'smem constant byte address 0x4 - core index']
  #allocation1 [shape = 'u32[144,128]{1,0:T(1,128)}', space=vmem, size = 0x12000, scoped, tag = 'internal scratch']
  %s0 = inlined_call_operand.hbm [shape: f32[2,256], index: 0, kind: input, shape index: {}]
  %s1 = inlined_call_operand.hbm [shape: f32[1,256], index: 1, kind: input, shape index: {}]
  %s2 = inlined_call_operand.hbm [shape: f32[2,256], index: 2, kind: output, shape index: {}]
  %s3 = sld [smem:[#allocation0]]
  $region26: #{tpu_custom_call.1} parent=0
    _
  %s5 = ssub.s32 1, %s3
  %s6 = scalar_select 0, %s5, %s3
  $region1: #{tpu_custom_call.1} parent=0
    #allocation2 [shape = 'u8[2048]{0}', space=vmem, size = 0x800, scoped, tag = 'input window, operand 0, single buffered']
    #allocation3 [shape = 's32[1]{0}', space=sflag, size = 0x4, scoped, tag = 'scoped memory for tpu_custom_call.1']
    #allocation4 [shape = 's32[1]{0}', space=sflag, size = 0x4, scoped, tag = 'scoped memory for tpu_custom_call.1']
    #allocation5 [shape = 'u8[1024]{0}', space=vmem, size = 0x400, scoped, tag = 'input window, operand 1, single buffered']
    #allocation6 [shape = 's32[1]{0}', space=sflag, size = 0x4, scoped, tag = 'scoped memory for tpu_custom_call.1']
    #allocation7 [shape = 'u8[2048]{0}', space=vmem, size = 0x800, scoped, tag = 'output window, operand 0, single buffered']
    %7 = vsyncpa [#allocation3], 0
    %8 = vsyncpa [#allocation6], 0
    %9 = vsyncpa [#allocation4], 0
    // Predicated region
    $region2: #{tpu_custom_call.1} parent=1 // pred_check
      _
    $region3: #{tpu_custom_call.1} parent=1 // pred_check_branch
      %11 = sbr.rel (0) target = $region5
    $region4: #{tpu_custom_call.1} parent=1 // pred_region
      %s13 = ssub.s32 64, 64
      %14 = vsyncadd [#allocation3], %s13
      %s16 = sshll.u32 [#allocation2], 4
      %s17 = int_to_ptr.vmem [resolvable:$true] %s16
      %19 = dma.hbm_to_vmem [thread:$0]  %s0, 64, %s17, [#allocation3]
    $region5: #{tpu_custom_call.1} parent=1 // pred_fallthru
      _
    // Predicated region
    $region6: #{tpu_custom_call.1} parent=1 // pred_check
      _
    $region7: #{tpu_custom_call.1} parent=1 // pred_check_branch
      %21 = sbr.rel (0) target = $region9
    $region8: #{tpu_custom_call.1} parent=1 // pred_region
      %s23 = ssub.s32 32, 32
      %24 = vsyncadd [#allocation6], %s23
      %s26 = sshll.u32 [#allocation5], 4
      %s27 = int_to_ptr.vmem [resolvable:$true] %s26
      %29 = dma.hbm_to_vmem [thread:$0]  %s1, 32, %s27, [#allocation6]
    $region9: #{tpu_custom_call.1} parent=1 // pred_fallthru
      _
    // Predicated region
    $region10: #{tpu_custom_call.1} parent=1 // pred_check
      _
    $region11: #{tpu_custom_call.1} parent=1 // pred_check_branch
      %31 = sbr.rel (0) target = $region13
    $region12: #{tpu_custom_call.1} parent=1 // pred_region
      %32 = dma.done [#allocation3], 64
    $region13: #{tpu_custom_call.1} parent=1 // pred_fallthru
      _
    // Predicated region
    $region14: #{tpu_custom_call.1} parent=1 // pred_check
      _
    $region15: #{tpu_custom_call.1} parent=1 // pred_check_branch
      %34 = sbr.rel (0) target = $region17
    $region16: #{tpu_custom_call.1} parent=1 // pred_region
      %35 = dma.done [#allocation6], 32
    $region17: #{tpu_custom_call.1} parent=1 // pred_fallthru
      _
    %v36 = vld [vmem:[#allocation2] sm:$0xf]
    %v37 = vld [vmem:[#allocation5] sm:$0x3]
    %v39 = vlaneseq
    %v40 = vshrl.u32 %v39, 7
    %v41 = vsub.s32 0, %v40
    %v42 = vrot.slane %v37, %v41
    %v43 = vlaneseq
    %v44 = vshrl.u32 %v43, 7
    %v45 = vsub.s32 1, %v44
    %v46 = vrot.slane %v37, %v45
    %v47 = vcombine.low %v42, %v46
    %v49 = vunpack.c.l.s4 1983009808
    %v50 = vunpack.c.0.s8 %v49
    %v51 = vlaneseq
    %v52 = vshrl.u32 %v51, 7
    %v53 = vsub.s32 %v50, %v52
    %v54 = vrot.slane %v47, %v53
    %v56 = vadd.f32 %v36, %v54
    %57 = vst [vmem:[#allocation7] sm:$0xf] %v56
    // Predicated region
    $region18: #{tpu_custom_call.1} parent=1 // pred_check
      _
    $region19: #{tpu_custom_call.1} parent=1 // pred_check_branch
      %59 = sbr.rel (0) target = $region21
    $region20: #{tpu_custom_call.1} parent=1 // pred_region
      %s61 = ssub.s32 64, 64
      %62 = vsyncadd [#allocation4], %s61
      %s64 = sshll.u32 [#allocation7], 4
      %s65 = int_to_ptr.vmem [resolvable:$true] %s64
      %67 = dma.vmem_to_hbm [thread:$0]  %s65, 64, %s2, [#allocation4]
    $region21: #{tpu_custom_call.1} parent=1 // pred_fallthru
      _
    // Predicated region
    $region22: #{tpu_custom_call.1} parent=1 // pred_check
      _
    $region23: #{tpu_custom_call.1} parent=1 // pred_check_branch
      %69 = sbr.rel (0) target = $region25
    $region24: #{tpu_custom_call.1} parent=1 // pred_region
      %70 = dma.done [#allocation4], 64
    $region25: #{tpu_custom_call.1} parent=1 // pred_fallthru
      _
    %71 = vsyncpa [#allocation3], 1
    %72 = vsyncpa [#allocation6], 1
    %73 = vsyncpa [#allocation4], 1

</llo_original>
